<compile_context>
chip_gen: v7x
topology: tpu7x:2x2x1
jax: 0.10.0
libtpu: 0.0.40
codegen_flags: <defaults>
</compile_context>

<pallas_src>
import functools

import jax
import jax.numpy as jnp
from jax import lax
from jax.experimental import pallas as pl
from jax.experimental.pallas import tpu as pltpu


def _round_up(x, m):
    return ((x + m - 1) // m) * m


# ------------------------------------------------------------------
# Kernel 1: projection scores = sigmoid(X @ (0.01 w) + 0.01 b)
# ------------------------------------------------------------------
def _scores_kernel(x_ref, w_ref, b_ref, s_ref):
    s = jnp.dot(x_ref[...], w_ref[...], preferred_element_type=jnp.float32)
    s_ref[...] = jax.nn.sigmoid(s + b_ref[0]).astype(s_ref.dtype)


def compute_scores(X, w, b):
    N, in_dim = X.shape
    # Row tile ~1 MiB of X per block, capped at 2048 rows, multiple of 8.
    max_rows = max(8, ((1 << 20) // max(1, 4 * in_dim)) // 8 * 8)
    tn = int(min(2048, max_rows, _round_up(N, 8)))
    tn = max(8, (tn // 8) * 8)
    n_rows = _round_up(N, tn)
    Xp = X if n_rows == N else jnp.pad(X, ((0, n_rows - N), (0, 0)))

    # Fold the 1/100 scale of the reference (sigmoid(proj(X)/100)) into w, b.
    ws = (w.astype(jnp.float32) * 0.01).reshape(in_dim, 1)
    bs = (b.astype(jnp.float32) * 0.01).reshape(1)

    out = pl.pallas_call(
        _scores_kernel,
        grid=(n_rows // tn,),
        in_specs=[
            pl.BlockSpec((tn, in_dim), lambda i: (i, 0)),          # X row tile
            pl.BlockSpec((in_dim, 1), lambda i: (0, 0)),           # weight
            pl.BlockSpec(memory_space=pltpu.MemorySpace.SMEM),     # bias scalar
        ],
        out_specs=pl.BlockSpec((tn, 1), lambda i: (i, 0)),
        out_shape=jax.ShapeDtypeStruct((n_rows, 1), jnp.float32),
        compiler_params=pltpu.CompilerParams(
            dimension_semantics=("parallel",),
            vmem_limit_bytes=32 * 1024 * 1024,
        ),
    )(Xp, ws, bs)
    return out[:N, 0]


# ------------------------------------------------------------------
# Kernel 2: pooling gather.
#   new_X[r, :]        = X[idx[r], :] * values[r]
#   new_A[r, c]        = A[idx[r], idx[c]]
# ------------------------------------------------------------------
def _pool_kernel(idx_rows_ref, idx_cols_ref, vals_ref, x_hbm, a_hbm,
                 newx_ref, newa_ref, x_buf, a_buf, acc_ref, sem_x, sem_a,
                 *, n_nodes, tk, num_k, zero_pad):
    i = pl.program_id(0)
    j = pl.program_id(1)
    tm = newx_ref.shape[0]
    tc = newa_ref.shape[1]
    base = i * tm

    # --- Row gather: only on the first column tile of each row tile; the
    # gathered rows persist in VMEM scratch across the whole j axis.
    @pl.when(j == 0)
    def _gather_rows():
        if zero_pad:
            # Padded contraction columns of a_buf must be zero: the one-hot is
            # zero there, but garbage * 0 could still be NaN.
            a_buf[...] = jnp.zeros_like(a_buf)

        def issue(r, carry):
            src = idx_rows_ref[base + r]
            pltpu.make_async_copy(
                x_hbm.at[pl.ds(src, 1), :],
                x_buf.at[pl.ds(r, 1), :],
                sem_x.at[r]).start()
            pltpu.make_async_copy(
                a_hbm.at[pl.ds(src, 1), :],
                a_buf.at[pl.ds(r, 1), pl.ds(0, n_nodes)],
                sem_a.at[r]).start()
            return carry

        lax.fori_loop(0, tm, issue, 0, unroll=False)

        def wait_x(r, carry):
            src = idx_rows_ref[base + r]
            pltpu.make_async_copy(
                x_hbm.at[pl.ds(src, 1), :],
                x_buf.at[pl.ds(r, 1), :],
                sem_x.at[r]).wait()
            return carry

        lax.fori_loop(0, tm, wait_x, 0, unroll=False)

        # new_X rows: gathered X rows scaled by their top-k score.
        newx_ref[...] = (x_buf[...] * vals_ref[...]).astype(newx_ref.dtype)

        def wait_a(r, carry):
            src = idx_rows_ref[base + r]
            pltpu.make_async_copy(
                a_hbm.at[pl.ds(src, 1), :],
                a_buf.at[pl.ds(r, 1), pl.ds(0, n_nodes)],
                sem_a.at[r]).wait()
            return carry

        lax.fori_loop(0, tm, wait_a, 0, unroll=False)

    # --- Column gather for this (TM, TC) output tile of new_A as a one-hot
    # MXU matmul, tiled over the contraction (node) axis so the one-hot never
    # exceeds a (TK, TC) slab in VMEM.  Padded column ids are -1 -> all-zero
    # one-hot columns -> zero output columns (sliced off in the wrapper).
    cols = idx_cols_ref[...]                              # (1, TC)

    if num_k == 1:
        n_full = a_buf.shape[1]
        row_ids = lax.broadcasted_iota(jnp.int32, (n_full, tc), 0)
        sel = (row_ids == cols).astype(a_buf.dtype)
        newa_ref[...] = jnp.dot(
            a_buf[...], sel, preferred_element_type=jnp.float32
        ).astype(newa_ref.dtype)
    else:
        acc_ref[...] = jnp.zeros_like(acc_ref)

        def kbody(kk, carry):
            off = pl.multiple_of(kk * tk, tk)
            row_ids = lax.broadcasted_iota(jnp.int32, (tk, tc), 0) + off
            sel = (row_ids == cols).astype(a_buf.dtype)
            acc_ref[...] += jnp.dot(
                a_buf[:, pl.ds(off, tk)], sel,
                preferred_element_type=jnp.float32)
            return carry

        lax.fori_loop(0, num_k, kbody, 0, unroll=False)
        newa_ref[...] = acc_ref[...].astype(newa_ref.dtype)


def pool_gather(A, X, idx, values, *, tm=None, tc=None, tk=512):
    N, D = X.shape
    M = idx.shape[0]

    if tm is None:
        tm = 128 if M >= 128 else _round_up(M, 8)     # output rows / grid step
    m_rows = _round_up(M, tm)

    if tc is None:
        tc = min(512, _round_up(M, 128))              # lane-dense new_A columns
    m_cols = _round_up(M, tc)

    # Contraction tiling of the one-hot matmul over the node axis.
    if N <= tk:
        tk_eff, n_pad = N, N
    else:
        tk_eff, n_pad = tk, _round_up(N, tk)
    num_k = n_pad // tk_eff
    zero_pad = n_pad != N

    idx32 = idx.astype(jnp.int32)
    idx_rows = jnp.zeros((m_rows,), jnp.int32).at[:M].set(idx32)        # pad -> row 0
    idx_cols = jnp.full((1, m_cols), -1, jnp.int32).at[0, :M].set(idx32)
    vals = jnp.zeros((m_rows, 1), jnp.float32).at[:M, 0].set(
        values.astype(jnp.float32))

    kernel = functools.partial(
        _pool_kernel, n_nodes=N, tk=tk_eff, num_k=num_k, zero_pad=zero_pad)

    grid_spec = pltpu.PrefetchScalarGridSpec(
        num_scalar_prefetch=1,                     # idx_rows -> SMEM (drives DMAs)
        grid=(m_rows // tm, m_cols // tc),
        in_specs=[
            pl.BlockSpec((1, tc), lambda i, j, idx_r: (0, j)),     # column ids
            pl.BlockSpec((tm, 1), lambda i, j, idx_r: (i, 0)),     # top-k values
            pl.BlockSpec(memory_space=pl.ANY),                     # X stays in HBM
            pl.BlockSpec(memory_space=pl.ANY),                     # A stays in HBM
        ],
        out_specs=[
            pl.BlockSpec((tm, D), lambda i, j, idx_r: (i, 0)),
            pl.BlockSpec((tm, tc), lambda i, j, idx_r: (i, j)),
        ],
        scratch_shapes=[
            pltpu.VMEM((tm, D), X.dtype),           # gathered X rows
            pltpu.VMEM((tm, n_pad), A.dtype),       # gathered A rows (live over j)
            pltpu.VMEM((tm, tc), jnp.float32),      # f32 matmul accumulator
            pltpu.SemaphoreType.DMA((tm,)),         # X row-DMA semaphores
            pltpu.SemaphoreType.DMA((tm,)),         # A row-DMA semaphores
        ],
    )

    # VMEM budget from the actual footprint (scratch + double-buffered blocks
    # + one-hot slab), with headroom, capped at 48 MiB for v7x's 64 MiB core.
    itemsize = 4
    footprint = itemsize * (
        tm * n_pad + tm * D + tm * tc
        + 2 * (tm * D + tm * tc + tc + tm)
        + 3 * tk_eff * tc)
    vmem_limit = int(min(max(2 * footprint, 16 * 1024 * 1024),
                         48 * 1024 * 1024))

    new_X_pad, new_A_pad = pl.pallas_call(
        kernel,
        grid_spec=grid_spec,
        out_shape=(
            jax.ShapeDtypeStruct((m_rows, D), X.dtype),
            jax.ShapeDtypeStruct((m_rows, m_cols), A.dtype),
        ),
        compiler_params=pltpu.CompilerParams(
            dimension_semantics=("parallel", "arbitrary"),
            vmem_limit_bytes=vmem_limit,
        ),
    )(idx_rows, idx_cols, vals, X, A)

    return new_A_pad[:M, :M], new_X_pad[:M, :]


# ------------------------------------------------------------------
# GraphPool forward
# ------------------------------------------------------------------
@functools.partial(jax.jit, static_argnames=("k",))
def graph_pool_forward(A, X, w, b, *, k):
    N = A.shape[0]
    M = int(k * N)

    scores = compute_scores(X, w, b)          # [N]

    if M == 0:
        return (jnp.zeros((0, 0), A.dtype),
                jnp.zeros((0, X.shape[1]), X.dtype),
                jnp.zeros((0,), jnp.int32))

    # TODO(synk): top-k / sorting has no clean Pallas TPU primitive; stays in
    # JAX (tie-breaking may differ from torch.topk on exactly-equal scores).
    values, idx = jax.lax.top_k(scores, M)

    new_A, new_X = pool_gather(A, X, idx, values)
    return new_A, new_X, idx


if __name__ == "__main__":
    key = jax.random.PRNGKey(0)
    N, in_dim, k = 16, 32, 0.5

    k_a, k_x, k_w, k_b = jax.random.split(key, 4)
    A = jax.random.uniform(k_a, (N, N), dtype=jnp.float32)
    X = jax.random.normal(k_x, (N, in_dim), dtype=jnp.float32)

    # deterministic init of nn.Linear(in_dim, 1): weight stored transposed as
    # [in_dim, 1], bias [1]
    w = jax.random.normal(k_w, (in_dim, 1), dtype=jnp.float32) * 0.1
    b = jax.random.normal(k_b, (1,), dtype=jnp.float32) * 0.1

    new_A, new_X, idx = graph_pool_forward(A, X, w, b, k=k)
    jax.block_until_ready((new_A, new_X, idx))

    # reference check in plain JAX
    scores_ref = jax.nn.sigmoid((X @ w + b).squeeze(-1) / 100.0)
    vals_ref, idx_ref = jax.lax.top_k(scores_ref, int(k * N))
    newx_ref = X[idx_ref, :] * vals_ref[:, None]
    newa_ref = A[idx_ref, :][:, idx_ref]
    assert jnp.allclose(new_X, newx_ref, atol=1e-5)
    assert jnp.allclose(new_A, newa_ref, atol=1e-5)
    assert jnp.array_equal(idx, idx_ref)

    print("KERNEL_OK")
</pallas_src>

<mosaic_0001>
module attributes {stable_mosaic.version = 11 : i64} {
  func.func @_scores_kernel(%arg0: i32, %arg1: memref<16x32xf32, #tpu.memory_space<vmem>>, %arg2: memref<32x1xf32, #tpu.memory_space<vmem>>, %arg3: memref<1xf32, #tpu.memory_space<smem>>, %arg4: memref<16x1xf32, #tpu.memory_space<vmem>>) attributes {dimension_semantics = [#tpu.dimension_semantics<parallel>], iteration_bounds = array<i64: 1>, scalar_prefetch = 0 : i64, scratch_operands = 0 : i64, tpu.core_type = #tpu.core_type<tc>, window_params = [{transform_indices = @transform_0, window_bounds = array<i64: 16, 32>}, {pipeline_mode = #tpu.pipeline_mode<synchronous>, transform_indices = @transform_1, window_bounds = array<i64: 32, 1>}, {transform_indices = @transform_2, window_bounds = array<i64: 1>}, {transform_indices = @transform_3, window_bounds = array<i64: 16, 1>}]} {
    %c0 = arith.constant 0 : index
    %c0_0 = arith.constant 0 : index
    %0 = vector.load %arg1[%c0, %c0_0] : memref<16x32xf32, #tpu.memory_space<vmem>>, vector<16x32xf32>
    %c0_1 = arith.constant 0 : index
    %c0_2 = arith.constant 0 : index
    %1 = vector.load %arg2[%c0_1, %c0_2] : memref<32x1xf32, #tpu.memory_space<vmem>>, vector<32x1xf32>
    %cst = arith.constant dense<0.000000e+00> : vector<16x1xf32>
    %2 = tpu.matmul %0, %1, %cst {dimension_numbers = #tpu.dot_dimension_numbers<[1], [0], [0], [1], [0, 0, 1, 1], [], []>} : vector<16x32xf32>, vector<32x1xf32>, vector<16x1xf32> -> vector<16x1xf32>
    %c0_3 = arith.constant 0 : index
    %3 = memref.load %arg3[%c0_3] : memref<1xf32, #tpu.memory_space<smem>>
    %4 = vector.broadcast %3 : f32 to vector<16x1xf32>
    %5 = arith.addf %2, %4 : vector<16x1xf32>
    %6 = arith.negf %5 : vector<16x1xf32>
    %7 = math.exp %6 : vector<16x1xf32>
    %cst_4 = arith.constant 1.000000e+00 : f32
    %8 = vector.broadcast %cst_4 : f32 to vector<16x1xf32>
    %9 = arith.addf %8, %7 : vector<16x1xf32>
    %10 = arith.divf %8, %9 : vector<16x1xf32>
    %c0_5 = arith.constant 0 : index
    %c0_6 = arith.constant 0 : index
    %11 = vector.load %arg4[%c0_5, %c0_6] : memref<16x1xf32, #tpu.memory_space<vmem>>, vector<16x1xf32>
    tpu.vector_store %arg4[%c0_5, %c0_6], %10 {strides = array<i32>} : memref<16x1xf32, #tpu.memory_space<vmem>>, vector<16x1xf32>,
    return
  }
  func.func @transform_0(%arg0: i32) -> (i32, i32) {
    %c0_i32 = arith.constant 0 : i32
    %c0_i32_0 = arith.constant 0 : i32
    return %arg0, %c0_i32 : i32, i32
  }
  func.func @transform_1(%arg0: i32) -> (i32, i32) {
    %c0_i32 = arith.constant 0 : i32
    %c0_i32_0 = arith.constant 0 : i32
    %c0_i32_1 = arith.constant 0 : i32
    return %c0_i32, %c0_i32_0 : i32, i32
  }
  func.func @transform_2(%arg0: i32) -> i32 {
    %c0_i32 = arith.constant 0 : i32
    %c0_i32_0 = arith.constant 0 : i32
    return %c0_i32 : i32
  }
  func.func @transform_3(%arg0: i32) -> (i32, i32) {
    %c0_i32 = arith.constant 0 : i32
    %c0_i32_0 = arith.constant 0 : i32
    return %arg0, %c0_i32 : i32, i32
  }
}

module attributes {stable_mosaic.version = 11 : i64} {
  func.func @_pool_kernel(%arg0: i32, %arg1: i32, %arg2: memref<8xi32, #tpu.memory_space<smem>>, %arg3: memref<1x128xi32, #tpu.memory_space<vmem>>, %arg4: memref<8x1xf32, #tpu.memory_space<vmem>>, %arg5: memref<16x32xf32, #tpu.memory_space<any>>, %arg6: memref<16x16xf32, #tpu.memory_space<any>>, %arg7: memref<8x32xf32, #tpu.memory_space<vmem>>, %arg8: memref<8x128xf32, #tpu.memory_space<vmem>>, %arg9: memref<8x32xf32, #tpu.memory_space<vmem>>, %arg10: memref<8x16xf32, #tpu.memory_space<vmem>>, %arg11: memref<8x128xf32, #tpu.memory_space<vmem>>, %arg12: memref<8x!tpu.dma_semaphore, #tpu.memory_space<semaphore_mem>>, %arg13: memref<8x!tpu.dma_semaphore, #tpu.memory_space<semaphore_mem>>) attributes {dimension_semantics = [#tpu.dimension_semantics<parallel>, #tpu.dimension_semantics<arbitrary>], iteration_bounds = array<i64: 1, 1>, scalar_prefetch = 1 : i64, scratch_operands = 5 : i64, tpu.core_type = #tpu.core_type<tc>, window_params = [{transform_indices = @transform_0, window_bounds = array<i64: 1, 128>}, {transform_indices = @transform_1, window_bounds = array<i64: 8, 1>}, {}, {}, {transform_indices = @transform_4, window_bounds = array<i64: 8, 32>}, {transform_indices = @transform_5, window_bounds = array<i64: 8, 128>}]} {
    %c8_i32 = arith.constant 8 : i32
    %0 = arith.muli %arg0, %c8_i32 : i32
    %c0_i32 = arith.constant 0 : i32
    %1 = arith.cmpi eq, %arg1, %c0_i32 : i32
    %2 = arith.extui %1 : i1 to i32
    %c0_i32_0 = arith.constant 0 : i32
    %3 = arith.cmpi ne, %2, %c0_i32_0 : i32
    scf.if %3 {
      %c0_i32_6 = arith.constant 0 : i32
      %c8_i32_7 = arith.constant 8 : i32
      %13 = arith.addi %c0_i32_6, %c8_i32_7 : i32
      %c1_i32 = arith.constant 1 : i32
      scf.for %arg14 = %c0_i32_6 to %13 step %c1_i32  : i32 {
        %21 = arith.addi %0, %arg14 : i32
        %22 = arith.index_cast %21 : i32 to index
        %23 = memref.load %arg2[%22] : memref<8xi32, #tpu.memory_space<smem>>
        %c0_i32_23 = arith.constant 0 : i32
        %24 = tpu.memref_slice %arg5[%23, %c0_i32_23] : memref<16x32xf32, #tpu.memory_space<any>> -> memref<1x32xf32, #tpu.memory_space<any>>
        %c0_i32_24 = arith.constant 0 : i32
        %25 = tpu.memref_slice %arg9[%arg14, %c0_i32_24] : memref<8x32xf32, #tpu.memory_space<vmem>> -> memref<1x32xf32, #tpu.memory_space<vmem>>
        %26 = tpu.memref_slice %arg12[%arg14] : memref<8x!tpu.dma_semaphore, #tpu.memory_space<semaphore_mem>> -> memref<1x!tpu.dma_semaphore, #tpu.memory_space<semaphore_mem>>
        %27 = tpu.memref_squeeze %26 : memref<1x!tpu.dma_semaphore, #tpu.memory_space<semaphore_mem>> -> memref<!tpu.dma_semaphore, #tpu.memory_space<semaphore_mem>>
        tpu.enqueue_dma source(%24 : memref<1x32xf32, #tpu.memory_space<any>>) target(%25 : memref<1x32xf32, #tpu.memory_space<vmem>>) target_semaphore(%27 : memref<!tpu.dma_semaphore, #tpu.memory_space<semaphore_mem>>)
        %c0_i32_25 = arith.constant 0 : i32
        %28 = tpu.memref_slice %arg6[%23, %c0_i32_25] : memref<16x16xf32, #tpu.memory_space<any>> -> memref<1x16xf32, #tpu.memory_space<any>>
        %c0_i32_26 = arith.constant 0 : i32
        %29 = tpu.memref_slice %arg10[%arg14, %c0_i32_26] : memref<8x16xf32, #tpu.memory_space<vmem>> -> memref<1x16xf32, #tpu.memory_space<vmem>>
        %30 = tpu.memref_slice %arg13[%arg14] : memref<8x!tpu.dma_semaphore, #tpu.memory_space<semaphore_mem>> -> memref<1x!tpu.dma_semaphore, #tpu.memory_space<semaphore_mem>>
        %31 = tpu.memref_squeeze %30 : memref<1x!tpu.dma_semaphore, #tpu.memory_space<semaphore_mem>> -> memref<!tpu.dma_semaphore, #tpu.memory_space<semaphore_mem>>
        tpu.enqueue_dma source(%28 : memref<1x16xf32, #tpu.memory_space<any>>) target(%29 : memref<1x16xf32, #tpu.memory_space<vmem>>) target_semaphore(%31 : memref<!tpu.dma_semaphore, #tpu.memory_space<semaphore_mem>>)
      }
      %c8_i32_8 = arith.constant 8 : i32
      %c0_i32_9 = arith.constant 0 : i32
      %c8_i32_10 = arith.constant 8 : i32
      %14 = arith.addi %c0_i32_9, %c8_i32_10 : i32
      %c1_i32_11 = arith.constant 1 : i32
      scf.for %arg14 = %c0_i32_9 to %14 step %c1_i32_11  : i32 {
        %21 = arith.addi %0, %arg14 : i32
        %22 = arith.index_cast %21 : i32 to index
        %23 = memref.load %arg2[%22] : memref<8xi32, #tpu.memory_space<smem>>
        %c0_i32_23 = arith.constant 0 : i32
        %24 = tpu.memref_slice %arg5[%23, %c0_i32_23] : memref<16x32xf32, #tpu.memory_space<any>> -> memref<1x32xf32, #tpu.memory_space<any>>
        %c0_i32_24 = arith.constant 0 : i32
        %25 = tpu.memref_slice %arg9[%arg14, %c0_i32_24] : memref<8x32xf32, #tpu.memory_space<vmem>> -> memref<1x32xf32, #tpu.memory_space<vmem>>
        %26 = tpu.memref_slice %arg12[%arg14] : memref<8x!tpu.dma_semaphore, #tpu.memory_space<semaphore_mem>> -> memref<1x!tpu.dma_semaphore, #tpu.memory_space<semaphore_mem>>
        %27 = tpu.memref_squeeze %26 : memref<1x!tpu.dma_semaphore, #tpu.memory_space<semaphore_mem>> -> memref<!tpu.dma_semaphore, #tpu.memory_space<semaphore_mem>>
        tpu.wait_dma2 semaphore(%27 : memref<!tpu.dma_semaphore, #tpu.memory_space<semaphore_mem>>) src(%24 : memref<1x32xf32, #tpu.memory_space<any>>) dst(%25 : memref<1x32xf32, #tpu.memory_space<vmem>>)
      }
      %c8_i32_12 = arith.constant 8 : i32
      %c0_13 = arith.constant 0 : index
      %c0_14 = arith.constant 0 : index
      %15 = vector.load %arg9[%c0_13, %c0_14] : memref<8x32xf32, #tpu.memory_space<vmem>>, vector<8x32xf32>
      %c0_15 = arith.constant 0 : index
      %c0_16 = arith.constant 0 : index
      %16 = vector.load %arg4[%c0_15, %c0_16] : memref<8x1xf32, #tpu.memory_space<vmem>>, vector<8x1xf32>
      %17 = vector.broadcast %16 : vector<8x1xf32> to vector<8x32xf32>
      %18 = arith.mulf %15, %17 : vector<8x32xf32>
      %c0_17 = arith.constant 0 : index
      %c0_18 = arith.constant 0 : index
      %19 = vector.load %arg7[%c0_17, %c0_18] : memref<8x32xf32, #tpu.memory_space<vmem>>, vector<8x32xf32>
      tpu.vector_store %arg7[%c0_17, %c0_18], %18 {strides = array<i32>} : memref<8x32xf32, #tpu.memory_space<vmem>>, vector<8x32xf32>,
      %c0_i32_19 = arith.constant 0 : i32
      %c8_i32_20 = arith.constant 8 : i32
      %20 = arith.addi %c0_i32_19, %c8_i32_20 : i32
      %c1_i32_21 = arith.constant 1 : i32
      scf.for %arg14 = %c0_i32_19 to %20 step %c1_i32_21  : i32 {
        %21 = arith.addi %0, %arg14 : i32
        %22 = arith.index_cast %21 : i32 to index
        %23 = memref.load %arg2[%22] : memref<8xi32, #tpu.memory_space<smem>>
        %c0_i32_23 = arith.constant 0 : i32
        %24 = tpu.memref_slice %arg6[%23, %c0_i32_23] : memref<16x16xf32, #tpu.memory_space<any>> -> memref<1x16xf32, #tpu.memory_space<any>>
        %c0_i32_24 = arith.constant 0 : i32
        %25 = tpu.memref_slice %arg10[%arg14, %c0_i32_24] : memref<8x16xf32, #tpu.memory_space<vmem>> -> memref<1x16xf32, #tpu.memory_space<vmem>>
        %26 = tpu.memref_slice %arg13[%arg14] : memref<8x!tpu.dma_semaphore, #tpu.memory_space<semaphore_mem>> -> memref<1x!tpu.dma_semaphore, #tpu.memory_space<semaphore_mem>>
        %27 = tpu.memref_squeeze %26 : memref<1x!tpu.dma_semaphore, #tpu.memory_space<semaphore_mem>> -> memref<!tpu.dma_semaphore, #tpu.memory_space<semaphore_mem>>
        tpu.wait_dma2 semaphore(%27 : memref<!tpu.dma_semaphore, #tpu.memory_space<semaphore_mem>>) src(%24 : memref<1x16xf32, #tpu.memory_space<any>>) dst(%25 : memref<1x16xf32, #tpu.memory_space<vmem>>)
      }
      %c8_i32_22 = arith.constant 8 : i32
    } else {
    }
    %c0 = arith.constant 0 : index
    %c0_1 = arith.constant 0 : index
    %4 = vector.load %arg3[%c0, %c0_1] : memref<1x128xi32, #tpu.memory_space<vmem>>, vector<1x128xi32>
    %5 = tpu.iota {dimensions = array<i32: 0>} : vector<16x128xi32>
    %6 = vector.broadcast %4 : vector<1x128xi32> to vector<16x128xi32>
    %7 = arith.cmpi eq, %5, %6 : vector<16x128xi32>
    %8 = arith.extui %7 : vector<16x128xi1> to vector<16x128xi32>
    %9 = arith.sitofp %8 : vector<16x128xi32> to vector<16x128xf32>
    %c0_2 = arith.constant 0 : index
    %c0_3 = arith.constant 0 : index
    %10 = vector.load %arg10[%c0_2, %c0_3] : memref<8x16xf32, #tpu.memory_space<vmem>>, vector<8x16xf32>
    %cst = arith.constant dense<0.000000e+00> : vector<8x128xf32>
    %11 = tpu.matmul %10, %9, %cst {dimension_numbers = #tpu.dot_dimension_numbers<[1], [0], [0], [1], [0, 0, 1, 1], [], []>} : vector<8x16xf32>, vector<16x128xf32>, vector<8x128xf32> -> vector<8x128xf32>
    %c0_4 = arith.constant 0 : index
    %c0_5 = arith.constant 0 : index
    %12 = vector.load %arg8[%c0_4, %c0_5] : memref<8x128xf32, #tpu.memory_space<vmem>>, vector<8x128xf32>
    tpu.vector_store %arg8[%c0_4, %c0_5], %11 {strides = array<i32>} : memref<8x128xf32, #tpu.memory_space<vmem>>, vector<8x128xf32>,
    return
  }
  func.func @transform_0(%arg0: i32, %arg1: i32, %arg2: memref<8xi32, #tpu.memory_space<smem>>) -> (i32, i32) {
    %c0_i32 = arith.constant 0 : i32
    %c0_i32_0 = arith.constant 0 : i32
    return %c0_i32, %arg1 : i32, i32
  }
  func.func @transform_1(%arg0: i32, %arg1: i32, %arg2: memref<8xi32, #tpu.memory_space<smem>>) -> (i32, i32) {
    %c0_i32 = arith.constant 0 : i32
    %c0_i32_0 = arith.constant 0 : i32
    return %arg0, %c0_i32 : i32, i32
  }
  func.func @transform_4(%arg0: i32, %arg1: i32, %arg2: memref<8xi32, #tpu.memory_space<smem>>) -> (i32, i32) {
    %c0_i32 = arith.constant 0 : i32
    %c0_i32_0 = arith.constant 0 : i32
    return %arg0, %c0_i32 : i32, i32
  }
  func.func @transform_5(%arg0: i32, %arg1: i32, %arg2: memref<8xi32, #tpu.memory_space<smem>>) -> (i32, i32) {
    %c0_i32 = arith.constant 0 : i32
    return %arg0, %arg1 : i32, i32
  }
}

</mosaic_0001>

<llo_original>
// kernel: graph_pool_forward.2
$region0: #{graph_pool_forward.2}
  #allocation0 [shape = 'u32[]', space=smem, size = 0x4, offset = 0x4, fixed_abs, tag = 'smem constant byte address 0x4 - core index']
  #allocation1 [shape = 'u32[144,128]{1,0:T(1,128)}', space=vmem, size = 0x12000, scoped, tag = 'internal scratch']
  #allocation2 [shape = 'f32[1]{0:T(128)S(6)}', space=smem, size = 0x200, scoped, tag = 'scoped memory for graph_pool_forward.2']
  %s0 = inlined_call_operand.vmem [shape: f32[16,32], index: 0, kind: input, shape index: {}]
  %s1 = inlined_call_operand.vmem [shape: f32[32,1], index: 1, kind: input, shape index: {}]
  %s2 = inlined_call_operand.<no memory space> [shape: f32[1], index: 2, kind: input, shape index: {}]
  %s3 = inlined_call_operand.vmem [shape: f32[16,1], index: 3, kind: output, shape index: {}]
  %s4 = sld [smem:[#allocation0]]
  $region22: #{graph_pool_forward.2} parent=0
    _
  %s6 = ssub.s32 1, %s4
  %s7 = scalar_select 0, %s6, %s4
  %8 = sst [smem:[#allocation2]] %s2
  // Predicated region
  $region2: #{graph_pool_forward.2} parent=0 // pred_check
    _
  $region3: #{graph_pool_forward.2} parent=0 // pred_check_branch
    %10 = sbr.rel (0) target = $region5
  $region4: #{graph_pool_forward.2} parent=0 // pred_region
    _
  $region5: #{graph_pool_forward.2} parent=0 // pred_fallthru
    _
  // Predicated region
  $region6: #{graph_pool_forward.2} parent=0 // pred_check
    _
  $region7: #{graph_pool_forward.2} parent=0 // pred_check_branch
    %12 = sbr.rel (0) target = $region9
  $region8: #{graph_pool_forward.2} parent=0 // pred_region
    _
  $region9: #{graph_pool_forward.2} parent=0 // pred_fallthru
    _
  // Predicated region
  $region10: #{graph_pool_forward.2} parent=0 // pred_check
    _
  $region11: #{graph_pool_forward.2} parent=0 // pred_check_branch
    %14 = sbr.rel (0) target = $region13
  $region12: #{graph_pool_forward.2} parent=0 // pred_region
    _
  $region13: #{graph_pool_forward.2} parent=0 // pred_fallthru
    _
  %v15 = vld [vmem:[%s0] sm:$0xff]
  %v16 = vld [vmem:[%s0 + $0x8] sm:$0xff]
  %v17 = vld [vmem:[%s1] sm:$0xff]
  %v18 = vld [vmem:[%s1 + $0x8] sm:$0xff]
  %v19 = vld [vmem:[%s1 + $0x10] sm:$0xff]
  %v20 = vld [vmem:[%s1 + $0x18] sm:$0xff]
  %s21 = sld [smem:[#allocation2]]
  %v22 = vstv %s21
  %vm23 = vcmask 261120
  %v25 = vsel %vm23, %v15, 0
  %v28 = vsel %vm23, %v16, 0
  %30 = vmatprep.subr.mxu0 0.0
  %31 = vmatpush1.msra.mxu0 %v17
  %32 = vmatprep.subr.mxu0 0.0
  %33 = vmatpush1.msra.mxu0 %v18
  %34 = vmatprep.subr.mxu0 0.0
  %35 = vmatpush1.msra.mxu0 %v19
  %36 = vmatprep.subr.mxu0 0.0
  %37 = vmatpush1.msra.mxu0 %v20
  %38 = vmatprep.subr.mxu0 0.0
  %39 = vmatpush1.msra.mxu0 0.0
  %40 = vmatprep.subr.mxu0 0.0
  %41 = vmatpush1.msra.mxu0 0.0
  %42 = vmatprep.subr.mxu0 0.0
  %43 = vmatpush1.msra.mxu0 0.0
  %44 = vmatprep.subr.mxu0 0.0
  %45 = vmatpush1.msra.mxu0 0.0
  %46 = vmatprep.subr.mxu0 0.0
  %47 = vmatpush1.msra.mxu0 0.0
  %48 = vmatprep.subr.mxu0 0.0
  %49 = vmatpush1.msra.mxu0 0.0
  %50 = vmatprep.subr.mxu0 0.0
  %51 = vmatpush1.msra.mxu0 0.0
  %52 = vmatprep.subr.mxu0 0.0
  %53 = vmatpush1.msra.mxu0 0.0
  %54 = vmatprep.subr.mxu0 0.0
  %55 = vmatpush1.msra.mxu0 0.0
  %56 = vmatprep.subr.mxu0 0.0
  %57 = vmatpush1.msra.mxu0 0.0
  %58 = vmatprep.subr.mxu0 0.0
  %59 = vmatpush1.msra.mxu0 0.0
  %60 = vmatprep.subr.mxu0 0.0
  %61 = vmatpush1.msra.mxu0 0.0
  %62 = vmatprep.subr.mxu0 0.0
  %63 = vmatpush1.msra.mxu0 0.0
  %64 = vmatprep.subr.mxu0 0.0
  %65 = vmatpush1.msra.mxu0 0.0
  %66 = vmatprep.subr.mxu0 0.0
  %67 = vmatpush1.msra.mxu0 0.0
  %68 = vmatprep.subr.mxu0 0.0
  %69 = vmatpush1.msra.mxu0 0.0
  %70 = vmatprep.subr.mxu0 0.0
  %71 = vmatpush1.msra.mxu0 0.0
  %72 = vmatprep.subr.mxu0 0.0
  %73 = vmatpush1.msra.mxu0 0.0
  %74 = vmatprep.subr.mxu0 0.0
  %75 = vmatpush1.msra.mxu0 0.0
  %76 = vmatprep.subr.mxu0 0.0
  %77 = vmatpush1.msra.mxu0 0.0
  %78 = vmatprep.subr.mxu0 0.0
  %79 = vmatpush1.msra.mxu0 0.0
  %80 = vmatprep.subr.mxu0 0.0
  %81 = vmatpush1.msra.mxu0 0.0
  %82 = vmatprep.subr.mxu0 0.0
  %83 = vmatpush1.msra.mxu0 0.0
  %84 = vmatprep.subr.mxu0 0.0
  %85 = vmatpush1.msra.mxu0 0.0
  %86 = vmatprep.subr.mxu0 0.0
  %87 = vmatpush1.msra.mxu0 0.0
  %88 = vmatprep.subr.mxu0 0.0
  %89 = vmatpush1.msra.mxu0 0.0
  %90 = vmatprep.subr.mxu0 0.0
  %91 = vmatpush1.msra.mxu0 0.0
  %92 = vmatprep.subr.mxu0 0.0
  %93 = vmatpush1.msra.mxu0 0.0
  %94 = vmatprep.mubr.f32.mxu0 0.0
  %95 = vmatmul.mubr.f32.gmra.mrb[0].mxu0 %v25
  %v96 = vpop.f32.mrb[0].mxu0
  %v97 = vadd.f32 %v22, %v96
  %v98 = vpop.f32.mrb[0].mxu0
  %99 = vmatprep.mubr.f32.mxu0 0.0
  %100 = vmatmul.mubr.f32.gmra.mrb[0].mxu0 %v28
  %v101 = vpop.f32.mrb[0].mxu0
  %v102 = vadd.f32 %v22, %v101
  %v103 = vpop.f32.mrb[0].mxu0
  %104 = vdwg.mxu0
  %v105 = vxor.u32 %v97, 2147483648
  %v106 = vxor.u32 %v102, 2147483648
  %v107 = vmul.f32 %v105, 1.442695
  %v108 = vpow.pop %v107
  %v109 = vmul.f32 %v106, 1.442695
  %v110 = vpow.pop %v109
  %v111 = vadd.f32 %v108, 1.0
  %v112 = vadd.f32 %v110, 1.0
  %v113 = vrcp.pop %v111
  %v114 = vmul.f32 1.0, %v113
  %v115 = vrcp.pop %v112
  %v116 = vmul.f32 1.0, %v115
  %vm117 = vcmask 7168
  %118 = vst.msk [vmem:[%s3] sm:$0xff] %vm117, %v114
  %119 = vst.msk [vmem:[%s3 + $0x8] sm:$0xff] %vm117, %v116
  // Predicated region
  $region14: #{graph_pool_forward.2} parent=0 // pred_check
    _
  $region15: #{graph_pool_forward.2} parent=0 // pred_check_branch
    %121 = sbr.rel (0) target = $region17
  $region16: #{graph_pool_forward.2} parent=0 // pred_region
    _
  $region17: #{graph_pool_forward.2} parent=0 // pred_fallthru
    _
  // Predicated region
  $region18: #{graph_pool_forward.2} parent=0 // pred_check
    _
  $region19: #{graph_pool_forward.2} parent=0 // pred_check_branch
    %123 = sbr.rel (0) target = $region21
  $region20: #{graph_pool_forward.2} parent=0 // pred_region
    _
  $region21: #{graph_pool_forward.2} parent=0 // pred_fallthru
    _

// kernel: graph_pool_forward.3
$region0: #{graph_pool_forward.3}
  #allocation0 [shape = 'u32[]', space=smem, size = 0x4, offset = 0x4, fixed_abs, tag = 'smem constant byte address 0x4 - core index']
  #allocation1 [shape = 'u32[144,128]{1,0:T(1,128)}', space=vmem, size = 0x12000, scoped, tag = 'internal scratch']
  #allocation2 [shape = 'f32[8,32]{1,0:T(8,128)}', space=vmem, size = 0x1000, scoped, tag = 'scratch operand']
  #allocation3 [shape = 'f32[8,16]{1,0:T(8,128)}', space=vmem, size = 0x1000, scoped, tag = 'scratch operand']
  #allocation4 [shape = 'f32[8,128]{1,0:T(8,128)}', space=vmem, size = 0x1000, scoped, tag = 'scratch operand']
  #allocation5 [shape = 's32[8]{0}', space=sflag, size = 0x20, scoped, tag = 'scratch operand']
  #allocation6 [shape = 's32[8]{0}', space=sflag, size = 0x20, scoped, tag = 'scratch operand']
  #allocation7 [shape = 's32[1]{0}', space=sflag, size = 0x4, scoped, tag = 'scoped memory for graph_pool_forward.3']
  #allocation8 [shape = 'u8[512]{0}', space=smem, size = 0x200, scoped, tag = 'prefetched SMEM operand 0']
  #allocation13 [shape = 's32[]', space=sflag, size = 0x4, offset = 0, fixed_abs, tag = 'sflag constant byte address 0x0 - dummy sync flag']
  #allocation14 [shape = 's32[]', space=sflag, size = 0x4, offset = 0, fixed_abs, tag = 'sflag constant byte address 0x0 - dummy sync flag']
  %s0 = inlined_call_operand.vmem [shape: s32[8], index: 0, kind: input, shape index: {}]
  %s1 = inlined_call_operand.vmem [shape: s32[1,128], index: 1, kind: input, shape index: {}]
  %s2 = inlined_call_operand.vmem [shape: f32[8,1], index: 2, kind: input, shape index: {}]
  %s3 = inlined_call_operand.vmem [shape: f32[16,32], index: 3, kind: input, shape index: {}]
  %s4 = inlined_call_operand.vmem [shape: f32[16,16], index: 4, kind: input, shape index: {}]
  %s5 = inlined_call_operand.hbm [shape: f32[8,32], index: 5, kind: output, shape index: {0}]
  %s6 = inlined_call_operand.hbm [shape: f32[8,128], index: 6, kind: output, shape index: {1}]
  %7 = xla_tuple %s5, %s6
  %s8 = sld [smem:[#allocation0]]
  $region111: #{graph_pool_forward.3} parent=0
    _
  %s10 = ssub.s32 1, %s8
  %s11 = scalar_select 0, %s10, %s8
  %s12 = sshll.u32 %s0, 4
  %s13 = int_to_ptr.vmem [resolvable:$true] %s12
  %15 = dma.vmem_to_smem %s13, 16, [#allocation8], [#allocation7]
  %16 = dma.done [#allocation7], 16
  %17 = sfence
  $region1: #{graph_pool_forward.3} parent=0
    #allocation9 [shape = 'u8[4096]{0}', space=vmem, size = 0x1000, scoped, tag = 'output window, operand 0, single buffered']
    #allocation10 [shape = 's32[1]{0}', space=sflag, size = 0x4, scoped, tag = 'scoped memory for graph_pool_forward.3']
    #allocation11 [shape = 'u8[4096]{0}', space=vmem, size = 0x1000, scoped, tag = 'output window, operand 1, single buffered']
    #allocation12 [shape = 's32[1]{0}', space=sflag, size = 0x4, scoped, tag = 'scoped memory for graph_pool_forward.3']
    %18 = vsyncpa [#allocation10], 0
    %19 = vsyncpa [#allocation12], 0
    // Predicated region
    $region2: #{graph_pool_forward.3} parent=1 // pred_check
      _
    $region3: #{graph_pool_forward.3} parent=1 // pred_check_branch
      %21 = sbr.rel (0) target = $region5
    $region4: #{graph_pool_forward.3} parent=1 // pred_region
      _
    $region5: #{graph_pool_forward.3} parent=1 // pred_fallthru
      _
    // Predicated region
    $region6: #{graph_pool_forward.3} parent=1 // pred_check
      _
    $region7: #{graph_pool_forward.3} parent=1 // pred_check_branch
      %23 = sbr.rel (0) target = $region9
    $region8: #{graph_pool_forward.3} parent=1 // pred_region
      _
    $region9: #{graph_pool_forward.3} parent=1 // pred_fallthru
      _
    %s24 = smul.u32 0, 8
    %p25 = scmp.eq.s32.totalorder 0, 0
    // Predicated region
    $region10: #{graph_pool_forward.3} parent=1 // pred_check
      %p26 = pneg %p25
    $region11: #{graph_pool_forward.3} parent=1 // pred_check_branch
      %28 = sbr.rel (%p26) target = $region13
    $region12: #{graph_pool_forward.3} parent=1 // pred_region
      loop: start=0, step=1, limit=8
      $region14: #{graph_pool_forward.3} parent=12 // loop_pre_header
        _
      $region15: #{graph_pool_forward.3} parent=12 // loop_header
        %s30 = sphi 0, %s34
        %p31 = scmp.ge.s32.totalorder %s30, 8
      $region16: #{graph_pool_forward.3} parent=12 // loop_header_branch
        %33 = sbr.rel (%p31) target = $region20
      $region17: #{graph_pool_forward.3} parent=12 // loop_body
        %s35 = sadd.s32 %s24, %s30
        %s36 = sld [smem:[#allocation8 + %s35]]
        %s37 = scalar_lea.vmem %s3, %s36
        %s38 = scalar_lea.vmem [#allocation2], %s30
        %s39 = scalar_lea.sflag [#allocation5], %s30
        %p41 = scmp.lt.u32.totalorder 1, 8
        %p42 = pneg %p41
        // Predicated region
        $region21: #{graph_pool_forward.3} parent=17 // pred_check
          _
        $region22: #{graph_pool_forward.3} parent=17 // pred_check_branch
          %44 = sbr.rel (%p41) target = $region24
        $region23: #{graph_pool_forward.3} parent=17 // pred_region
          %s59 = sand.u32 1, 7
          %p60 = scmp.eq.s32.totalorder %s59, 0
          %p61 = pneg %p60
          // Predicated region
          $region36: #{graph_pool_forward.3} parent=23 // pred_check
            _
          $region37: #{graph_pool_forward.3} parent=23 // pred_check_branch
            %63 = sbr.rel (%p60) target = $region39
          $region38: #{graph_pool_forward.3} parent=23 // pred_region
            %s64 = sand.u32 1, 7
            %s65 = ssub.s32 1, %s64
            %s66 = scalar_lea.vmem %s37, %s65
            %s67 = ssub.s32 1, %s64
            %s68 = scalar_lea.vmem %s38, %s67 [#allocation2]
            %s69 = sshllo.u32 0, %s64
            loop: start=0, step=1, limit=1
            $region40: #{graph_pool_forward.3} parent=38 // loop_pre_header
              _
            $region41: #{graph_pool_forward.3} parent=38 // loop_header
              %s71 = sphi 0, %s75
              %p72 = scmp.ge.s32.totalorder %s71, 1
              %s76 = sphi %s66, %s66
              %s77 = sphi %s68, %s68
            $region42: #{graph_pool_forward.3} parent=38 // loop_header_branch
              %74 = sbr.rel (%p72) target = $region46
            $region43: #{graph_pool_forward.3} parent=38 // loop_body
              %v78 = vld [vmem:[%s76] sm:%s69]
              %79 = vst [vmem:[%s77] sm:%s69] %v78
            $region44: #{graph_pool_forward.3} parent=38 // loop_footer
              %s75 = sadd.s32 1, %s71
            $region45: #{graph_pool_forward.3} parent=38 // loop_footer_branch
              %70 = sbr.rel target = $region41
            $region46: #{graph_pool_forward.3} parent=38 // loop_exit
              _
          $region39: #{graph_pool_forward.3} parent=23 // pred_fallthru
            _
        $region24: #{graph_pool_forward.3} parent=17 // pred_fallthru
          _
        // Predicated region
        $region25: #{graph_pool_forward.3} parent=17 // pred_check
          %p45 = pneg %p41
        $region26: #{graph_pool_forward.3} parent=17 // pred_check_branch
          %47 = sbr.rel (%p45) target = $region28
        $region27: #{graph_pool_forward.3} parent=17 // pred_region
          %s48 = sshllo.u32 0, 1
          loop: start=0, step=1, limit=1
          $region29: #{graph_pool_forward.3} parent=27 // loop_pre_header
            _
          $region30: #{graph_pool_forward.3} parent=27 // loop_header
            %s50 = sphi 0, %s54
            %p51 = scmp.ge.s32.totalorder %s50, 1
            %s55 = sphi %s37, %s37
            %s56 = sphi %s38, %s38
          $region31: #{graph_pool_forward.3} parent=27 // loop_header_branch
            %53 = sbr.rel (%p51) target = $region35
          $region32: #{graph_pool_forward.3} parent=27 // loop_body
            %v57 = vld [vmem:[%s55] sm:%s48]
            %58 = vst [vmem:[%s56] sm:%s48] %v57
          $region33: #{graph_pool_forward.3} parent=27 // loop_footer
            %s54 = sadd.s32 1, %s50
          $region34: #{graph_pool_forward.3} parent=27 // loop_footer_branch
            %49 = sbr.rel target = $region30
          $region35: #{graph_pool_forward.3} parent=27 // loop_exit
            _
        $region28: #{graph_pool_forward.3} parent=17 // pred_fallthru
          _
        // Predicated region
        $region47: #{graph_pool_forward.3} parent=17 // pred_check
          _
        $region48: #{graph_pool_forward.3} parent=17 // pred_check_branch
          %82 = sbr.rel (0) target = $region50
        $region49: #{graph_pool_forward.3} parent=17 // pred_region
          %83 = vsyncadd %s39, 16
        $region50: #{graph_pool_forward.3} parent=17 // pred_fallthru
          _
        %s84 = scalar_lea.vmem %s4, %s36
        %s85 = scalar_lea.vmem [#allocation3], %s30
        %s86 = scalar_lea.sflag [#allocation6], %s30
        %p88 = scmp.lt.u32.totalorder 1, 8
        %p89 = pneg %p88
        // Predicated region
        $region51: #{graph_pool_forward.3} parent=17 // pred_check
          _
        $region52: #{graph_pool_forward.3} parent=17 // pred_check_branch
          %91 = sbr.rel (%p88) target = $region54
        $region53: #{graph_pool_forward.3} parent=17 // pred_region
          %s106 = sand.u32 1, 7
          %p107 = scmp.eq.s32.totalorder %s106, 0
          %p108 = pneg %p107
          // Predicated region
          $region66: #{graph_pool_forward.3} parent=53 // pred_check
            _
          $region67: #{graph_pool_forward.3} parent=53 // pred_check_branch
            %110 = sbr.rel (%p107) target = $region69
          $region68: #{graph_pool_forward.3} parent=53 // pred_region
            %s111 = sand.u32 1, 7
            %s112 = ssub.s32 1, %s111
            %s113 = scalar_lea.vmem %s84, %s112
            %s114 = ssub.s32 1, %s111
            %s115 = scalar_lea.vmem %s85, %s114 [#allocation3]
            %s116 = sshllo.u32 0, %s111
            loop: start=0, step=1, limit=1
            $region70: #{graph_pool_forward.3} parent=68 // loop_pre_header
              _
            $region71: #{graph_pool_forward.3} parent=68 // loop_header
              %s118 = sphi 0, %s122
              %p119 = scmp.ge.s32.totalorder %s118, 1
              %s123 = sphi %s113, %s113
              %s124 = sphi %s115, %s115
            $region72: #{graph_pool_forward.3} parent=68 // loop_header_branch
              %121 = sbr.rel (%p119) target = $region76
            $region73: #{graph_pool_forward.3} parent=68 // loop_body
              %v125 = vld [vmem:[%s123] sm:%s116]
              %126 = vst [vmem:[%s124] sm:%s116] %v125
            $region74: #{graph_pool_forward.3} parent=68 // loop_footer
              %s122 = sadd.s32 1, %s118
            $region75: #{graph_pool_forward.3} parent=68 // loop_footer_branch
              %117 = sbr.rel target = $region71
            $region76: #{graph_pool_forward.3} parent=68 // loop_exit
              _
          $region69: #{graph_pool_forward.3} parent=53 // pred_fallthru
            _
        $region54: #{graph_pool_forward.3} parent=17 // pred_fallthru
          _
        // Predicated region
        $region55: #{graph_pool_forward.3} parent=17 // pred_check
          %p92 = pneg %p88
        $region56: #{graph_pool_forward.3} parent=17 // pred_check_branch
          %94 = sbr.rel (%p92) target = $region58
        $region57: #{graph_pool_forward.3} parent=17 // pred_region
          %s95 = sshllo.u32 0, 1
          loop: start=0, step=1, limit=1
          $region59: #{graph_pool_forward.3} parent=57 // loop_pre_header
            _
          $region60: #{graph_pool_forward.3} parent=57 // loop_header
            %s97 = sphi 0, %s101
            %p98 = scmp.ge.s32.totalorder %s97, 1
            %s102 = sphi %s84, %s84
            %s103 = sphi %s85, %s85
          $region61: #{graph_pool_forward.3} parent=57 // loop_header_branch
            %100 = sbr.rel (%p98) target = $region65
          $region62: #{graph_pool_forward.3} parent=57 // loop_body
            %v104 = vld [vmem:[%s102] sm:%s95]
            %105 = vst [vmem:[%s103] sm:%s95] %v104
          $region63: #{graph_pool_forward.3} parent=57 // loop_footer
            %s101 = sadd.s32 1, %s97
          $region64: #{graph_pool_forward.3} parent=57 // loop_footer_branch
            %96 = sbr.rel target = $region60
          $region65: #{graph_pool_forward.3} parent=57 // loop_exit
            _
        $region58: #{graph_pool_forward.3} parent=17 // pred_fallthru
          _
        // Predicated region
        $region77: #{graph_pool_forward.3} parent=17 // pred_check
          _
        $region78: #{graph_pool_forward.3} parent=17 // pred_check_branch
          %129 = sbr.rel (0) target = $region80
        $region79: #{graph_pool_forward.3} parent=17 // pred_region
          %130 = vsyncadd %s86, 16
        $region80: #{graph_pool_forward.3} parent=17 // pred_fallthru
          _
      $region18: #{graph_pool_forward.3} parent=12 // loop_footer
        %s34 = sadd.s32 1, %s30
      $region19: #{graph_pool_forward.3} parent=12 // loop_footer_branch
        %29 = sbr.rel target = $region15
      $region20: #{graph_pool_forward.3} parent=12 // loop_exit
        _
      loop: start=0, step=1, limit=8
      $region81: #{graph_pool_forward.3} parent=12 // loop_pre_header
        _
      $region82: #{graph_pool_forward.3} parent=12 // loop_header
        %s132 = sphi 0, %s136
        %p133 = scmp.ge.s32.totalorder %s132, 8
      $region83: #{graph_pool_forward.3} parent=12 // loop_header_branch
        %135 = sbr.rel (%p133) target = $region87
      $region84: #{graph_pool_forward.3} parent=12 // loop_body
        %s137 = sadd.s32 %s24, %s132
        %s138 = sld [smem:[#allocation8 + %s137]]
        %s139 = scalar_lea.sflag [#allocation5], %s132
        %s140 = smul.u32 1, 1
        %s141 = sshll.u32 %s140, 4
        %142 = dma.done %s139, %s141
      $region85: #{graph_pool_forward.3} parent=12 // loop_footer
        %s136 = sadd.s32 1, %s132
      $region86: #{graph_pool_forward.3} parent=12 // loop_footer_branch
        %131 = sbr.rel target = $region82
      $region87: #{graph_pool_forward.3} parent=12 // loop_exit
        _
      %v143 = vld [vmem:[#allocation2] sm:$0xff]
      %v144 = vld [vmem:[%s2] sm:$0xff]
      %146 = vset.pattern.permute.xlu0 0
      %147 = vperm.xlu0 %146, %v144
      %v148 = vpop.permute.xlu0 %147
      %v150 = vmul.f32 %v143, %v148
      %vm151 = vcmask 261120
      %152 = vst.msk [vmem:[#allocation9] sm:$0xff] %vm151, %v150
      loop: start=0, step=1, limit=8
      $region88: #{graph_pool_forward.3} parent=12 // loop_pre_header
        _
      $region89: #{graph_pool_forward.3} parent=12 // loop_header
        %s154 = sphi 0, %s158
        %p155 = scmp.ge.s32.totalorder %s154, 8
      $region90: #{graph_pool_forward.3} parent=12 // loop_header_branch
        %157 = sbr.rel (%p155) target = $region94
      $region91: #{graph_pool_forward.3} parent=12 // loop_body
        %s159 = sadd.s32 %s24, %s154
        %s160 = sld [smem:[#allocation8 + %s159]]
        %s161 = scalar_lea.sflag [#allocation6], %s154
        %s162 = smul.u32 1, 1
        %s163 = sshll.u32 %s162, 4
        %164 = dma.done %s161, %s163
      $region92: #{graph_pool_forward.3} parent=12 // loop_footer
        %s158 = sadd.s32 1, %s154
      $region93: #{graph_pool_forward.3} parent=12 // loop_footer_branch
        %153 = sbr.rel target = $region89
      $region94: #{graph_pool_forward.3} parent=12 // loop_exit
        _
    $region13: #{graph_pool_forward.3} parent=1 // pred_fallthru
      _
    %v165 = vld [vmem:[%s1] sm:$0x1]
    %v166 = vlaneseq
    %v167 = vshrl.u32 %v166, 7
    %v168 = vadd.s32 %v167, 8
    %v169 = vlaneseq
    %v170 = vshrl.u32 %v169, 7
    %v171 = vsub.s32 0, %v170
    %v172 = vrot.slane %v165, %v171
    %vm173 = vcmp.eq.s32.totalorder %v167, %v172
    %vm174 = vcmp.eq.s32.totalorder %v168, %v172
    %v175 = vsel %vm173, 1, 0
    %v176 = vsel %vm174, 1, 0
    %v177 = vcvt.s32.f32 %v175
    %v178 = vcvt.s32.f32 %v176
    %v179 = vld [vmem:[#allocation3] sm:$0xff]
    %vm180 = vcmask 130048
    %v182 = vsel %vm180, %v179, 0
    %184 = vmatprep.subr.mxu0 0.0
    %185 = vmatpush1.msra.mxu0 %v177
    %186 = vmatprep.subr.mxu0 0.0
    %187 = vmatpush1.msra.mxu0 %v178
    %188 = vmatprep.subr.mxu0 0.0
    %189 = vmatpush1.msra.mxu0 0.0
    %190 = vmatprep.subr.mxu0 0.0
    %191 = vmatpush1.msra.mxu0 0.0
    %192 = vmatprep.subr.mxu0 0.0
    %193 = vmatpush1.msra.mxu0 0.0
    %194 = vmatprep.subr.mxu0 0.0
    %195 = vmatpush1.msra.mxu0 0.0
    %196 = vmatprep.subr.mxu0 0.0
    %197 = vmatpush1.msra.mxu0 0.0
    %198 = vmatprep.subr.mxu0 0.0
    %199 = vmatpush1.msra.mxu0 0.0
    %200 = vmatprep.subr.mxu0 0.0
    %201 = vmatpush1.msra.mxu0 0.0
    %202 = vmatprep.subr.mxu0 0.0
    %203 = vmatpush1.msra.mxu0 0.0
    %204 = vmatprep.subr.mxu0 0.0
    %205 = vmatpush1.msra.mxu0 0.0
    %206 = vmatprep.subr.mxu0 0.0
    %207 = vmatpush1.msra.mxu0 0.0
    %208 = vmatprep.subr.mxu0 0.0
    %209 = vmatpush1.msra.mxu0 0.0
    %210 = vmatprep.subr.mxu0 0.0
    %211 = vmatpush1.msra.mxu0 0.0
    %212 = vmatprep.subr.mxu0 0.0
    %213 = vmatpush1.msra.mxu0 0.0
    %214 = vmatprep.subr.mxu0 0.0
    %215 = vmatpush1.msra.mxu0 0.0
    %216 = vmatprep.subr.mxu0 0.0
    %217 = vmatpush1.msra.mxu0 0.0
    %218 = vmatprep.subr.mxu0 0.0
    %219 = vmatpush1.msra.mxu0 0.0
    %220 = vmatprep.subr.mxu0 0.0
    %221 = vmatpush1.msra.mxu0 0.0
    %222 = vmatprep.subr.mxu0 0.0
    %223 = vmatpush1.msra.mxu0 0.0
    %224 = vmatprep.subr.mxu0 0.0
    %225 = vmatpush1.msra.mxu0 0.0
    %226 = vmatprep.subr.mxu0 0.0
    %227 = vmatpush1.msra.mxu0 0.0
    %228 = vmatprep.subr.mxu0 0.0
    %229 = vmatpush1.msra.mxu0 0.0
    %230 = vmatprep.subr.mxu0 0.0
    %231 = vmatpush1.msra.mxu0 0.0
    %232 = vmatprep.subr.mxu0 0.0
    %233 = vmatpush1.msra.mxu0 0.0
    %234 = vmatprep.subr.mxu0 0.0
    %235 = vmatpush1.msra.mxu0 0.0
    %236 = vmatprep.subr.mxu0 0.0
    %237 = vmatpush1.msra.mxu0 0.0
    %238 = vmatprep.subr.mxu0 0.0
    %239 = vmatpush1.msra.mxu0 0.0
    %240 = vmatprep.subr.mxu0 0.0
    %241 = vmatpush1.msra.mxu0 0.0
    %242 = vmatprep.subr.mxu0 0.0
    %243 = vmatpush1.msra.mxu0 0.0
    %244 = vmatprep.subr.mxu0 0.0
    %245 = vmatpush1.msra.mxu0 0.0
    %246 = vmatprep.subr.mxu0 0.0
    %247 = vmatpush1.msra.mxu0 0.0
    %248 = vmatprep.mubr.f32.mxu0 0.0
    %249 = vmatmul.mubr.f32.gmra.mrb[0].mxu0 %v182
    %v250 = vpop.f32.mrb[0].mxu0
    %v251 = vadd.f32 0.0, %v250
    %v252 = vpop.f32.mrb[0].mxu0
    %253 = vdwg.mxu0
    %254 = vst [vmem:[#allocation11] sm:$0xff] %v251
    // Predicated region
    $region95: #{graph_pool_forward.3} parent=1 // pred_check
      _
    $region96: #{graph_pool_forward.3} parent=1 // pred_check_branch
      %256 = sbr.rel (0) target = $region98
    $region97: #{graph_pool_forward.3} parent=1 // pred_region
      %s258 = ssub.s32 128, 128
      %259 = vsyncadd [#allocation10], %s258
      %s261 = sshll.u32 [#allocation9], 4
      %s262 = int_to_ptr.vmem [resolvable:$true] %s261
      %264 = dma.vmem_to_hbm [thread:$0]  %s262, 128, %s5, [#allocation10]
    $region98: #{graph_pool_forward.3} parent=1 // pred_fallthru
      _
    // Predicated region
    $region99: #{graph_pool_forward.3} parent=1 // pred_check
      _
    $region100: #{graph_pool_forward.3} parent=1 // pred_check_branch
      %266 = sbr.rel (0) target = $region102
    $region101: #{graph_pool_forward.3} parent=1 // pred_region
      %s268 = ssub.s32 128, 128
      %269 = vsyncadd [#allocation12], %s268
      %s271 = sshll.u32 [#allocation11], 4
      %s272 = int_to_ptr.vmem [resolvable:$true] %s271
      %274 = dma.vmem_to_hbm [thread:$0]  %s272, 128, %s6, [#allocation12]
    $region102: #{graph_pool_forward.3} parent=1 // pred_fallthru
      _
    // Predicated region
    $region103: #{graph_pool_forward.3} parent=1 // pred_check
      _
    $region104: #{graph_pool_forward.3} parent=1 // pred_check_branch
      %276 = sbr.rel (0) target = $region106
    $region105: #{graph_pool_forward.3} parent=1 // pred_region
      %277 = dma.done [#allocation10], 128
    $region106: #{graph_pool_forward.3} parent=1 // pred_fallthru
      _
    // Predicated region
    $region107: #{graph_pool_forward.3} parent=1 // pred_check
      _
    $region108: #{graph_pool_forward.3} parent=1 // pred_check_branch
      %279 = sbr.rel (0) target = $region110
    $region109: #{graph_pool_forward.3} parent=1 // pred_region
      %280 = dma.done [#allocation12], 128
    $region110: #{graph_pool_forward.3} parent=1 // pred_fallthru
      _
    %281 = vsyncpa [#allocation10], 1
    %282 = vsyncpa [#allocation12], 1
  %283 = vsyncmov [#allocation5]
  %s284 = vpop.sfrf %283
  %p285 = scmp.eq.s32.totalorder %s284, 0
  %p286 = pneg %p285
  %288 = shalt.err (%p286)
  %s289 = scalar_lea.sflag [#allocation5], 1
  %290 = vsyncmov %s289
  %s291 = vpop.sfrf %290
  %p292 = scmp.eq.s32.totalorder %s291, 0
  %p293 = pneg %p292
  %295 = shalt.err (%p293)
  %s296 = scalar_lea.sflag [#allocation5], 2
  %297 = vsyncmov %s296
  %s298 = vpop.sfrf %297
  %p299 = scmp.eq.s32.totalorder %s298, 0
  %p300 = pneg %p299
  %302 = shalt.err (%p300)
  %s303 = scalar_lea.sflag [#allocation5], 3
  %304 = vsyncmov %s303
  %s305 = vpop.sfrf %304
  %p306 = scmp.eq.s32.totalorder %s305, 0
  %p307 = pneg %p306
  %309 = shalt.err (%p307)
  %s310 = scalar_lea.sflag [#allocation5], 4
  %311 = vsyncmov %s310
  %s312 = vpop.sfrf %311
  %p313 = scmp.eq.s32.totalorder %s312, 0
  %p314 = pneg %p313
  %316 = shalt.err (%p314)
  %s317 = scalar_lea.sflag [#allocation5], 5
  %318 = vsyncmov %s317
  %s319 = vpop.sfrf %318
  %p320 = scmp.eq.s32.totalorder %s319, 0
  %p321 = pneg %p320
  %323 = shalt.err (%p321)
  %s324 = scalar_lea.sflag [#allocation5], 6
  %325 = vsyncmov %s324
  %s326 = vpop.sfrf %325
  %p327 = scmp.eq.s32.totalorder %s326, 0
  %p328 = pneg %p327
  %330 = shalt.err (%p328)
  %s331 = scalar_lea.sflag [#allocation5], 7
  %332 = vsyncmov %s331
  %s333 = vpop.sfrf %332
  %p334 = scmp.eq.s32.totalorder %s333, 0
  %p335 = pneg %p334
  %337 = shalt.err (%p335)
  %338 = vsyncmov [#allocation6]
  %s339 = vpop.sfrf %338
  %p340 = scmp.eq.s32.totalorder %s339, 0
  %p341 = pneg %p340
  %343 = shalt.err (%p341)
  %s344 = scalar_lea.sflag [#allocation6], 1
  %345 = vsyncmov %s344
  %s346 = vpop.sfrf %345
  %p347 = scmp.eq.s32.totalorder %s346, 0
  %p348 = pneg %p347
  %350 = shalt.err (%p348)
  %s351 = scalar_lea.sflag [#allocation6], 2
  %352 = vsyncmov %s351
  %s353 = vpop.sfrf %352
  %p354 = scmp.eq.s32.totalorder %s353, 0
  %p355 = pneg %p354
  %357 = shalt.err (%p355)
  %s358 = scalar_lea.sflag [#allocation6], 3
  %359 = vsyncmov %s358
  %s360 = vpop.sfrf %359
  %p361 = scmp.eq.s32.totalorder %s360, 0
  %p362 = pneg %p361
  %364 = shalt.err (%p362)
  %s365 = scalar_lea.sflag [#allocation6], 4
  %366 = vsyncmov %s365
  %s367 = vpop.sfrf %366
  %p368 = scmp.eq.s32.totalorder %s367, 0
  %p369 = pneg %p368
  %371 = shalt.err (%p369)
  %s372 = scalar_lea.sflag [#allocation6], 5
  %373 = vsyncmov %s372
  %s374 = vpop.sfrf %373
  %p375 = scmp.eq.s32.totalorder %s374, 0
  %p376 = pneg %p375
  %378 = shalt.err (%p376)
  %s379 = scalar_lea.sflag [#allocation6], 6
  %380 = vsyncmov %s379
  %s381 = vpop.sfrf %380
  %p382 = scmp.eq.s32.totalorder %s381, 0
  %p383 = pneg %p382
  %385 = shalt.err (%p383)
  %s386 = scalar_lea.sflag [#allocation6], 7
  %387 = vsyncmov %s386
  %s388 = vpop.sfrf %387
  %p389 = scmp.eq.s32.totalorder %s388, 0
  %p390 = pneg %p389
  %392 = shalt.err (%p390)

</llo_original>
